<compile_context>
chip_gen: v6e
topology: v6e:2x2x1
jax: 0.10.0
libtpu: 0.0.40
codegen_flags: <defaults>
</compile_context>

<pallas_src>
import functools

import jax
import jax.numpy as jnp
from jax.experimental import pallas as pl
from jax.experimental.pallas import tpu as pltpu


def _round_up(v, m):
    return ((v + m - 1) // m) * m


def _cdiv(a, b):
    return (a + b - 1) // b


def _mlp_kernel(x_ref,
                w1_ref, b1_ref,
                w2_ref, b2_ref,
                w3_ref, b3_ref,
                w4_ref, b4_ref,
                o_ref):
    # Layer 1 (K = in_features): x arrives f32, cast to bf16 at the dot so the
    # MXU runs bf16 passes; accumulation stays f32.
    h = jnp.dot(x_ref[...].astype(jnp.bfloat16), w1_ref[...],
                preferred_element_type=jnp.float32)
    h = jnp.maximum(h + b1_ref[...], 0.0)                      # (tm, 128) f32

    # Layers 2/3 on lane-padded (128-wide) bf16 weights. Bias+ReLU stay in f32
    # (v5e has no bf16 VPU path); only the dot operands are bf16. Zero-padded
    # lanes stay exactly zero through bias-add (padded with 0) and ReLU.
    h = jnp.dot(h.astype(jnp.bfloat16), w2_ref[...],
                preferred_element_type=jnp.float32)
    h = jnp.maximum(h + b2_ref[...], 0.0)                      # (tm, 128) f32

    h = jnp.dot(h.astype(jnp.bfloat16), w3_ref[...],
                preferred_element_type=jnp.float32)
    h = jnp.maximum(h + b3_ref[...], 0.0)                      # (tm, 128) f32

    # Final 128 -> 1 layer: contract w4_row (1,128) against h's last dim
    # (the q @ k^T / trans_b pattern, handled natively by the MXU) so the
    # store is a lane-dense (1, tm) row instead of a masked 1-lane column.
    logits = jax.lax.dot_general(
        w4_ref[...], h.astype(jnp.bfloat16), (((1,), (1,)), ((), ())),
        preferred_element_type=jnp.float32)                    # (1, tm)
    o_ref[0] = jax.nn.sigmoid(logits + b4_ref[...])            # (1, tm)


@functools.partial(jax.jit, static_argnames=("tm",))
def simple_net_forward(x, params, *, tm=1024):
    """SimpleNet forward. x: (N, F) float32 -> (N, 1) float32."""
    n, f = x.shape
    w1, b1, w2, b2, w3, b3, w4, b4 = params
    d1, d2, d3 = w1.shape[1], w2.shape[1], w3.shape[1]          # 128, 52, 13
    d1p, d2p, d3p = (_round_up(d, 128) for d in (d1, d2, d3))

    # Zero-pad hidden widths to full lanes. Weights (tiny, converted once per
    # call) are pre-cast to bf16; biases stay f32.
    w1p = jnp.pad(w1, ((0, 0), (0, d1p - d1))).astype(jnp.bfloat16)
    b1p = jnp.pad(b1, ((0, 0), (0, d1p - d1)))
    w2p = jnp.pad(w2, ((0, d1p - d1), (0, d2p - d2))).astype(jnp.bfloat16)
    b2p = jnp.pad(b2, ((0, 0), (0, d2p - d2)))
    w3p = jnp.pad(w3, ((0, d2p - d2), (0, d3p - d3))).astype(jnp.bfloat16)
    b3p = jnp.pad(b3, ((0, 0), (0, d3p - d3)))
    w4r = jnp.pad(w4.T, ((0, 0), (0, d3p - d3))).astype(jnp.bfloat16)  # (1, d3p)
    b4p = b4                                                    # (1, 1)

    # Row tiling: balanced tiles (caps padding waste at one 16-row group), and
    # at least 2 tiles for non-trivial batches so both v7x TensorCores get
    # work under dimension_semantics=("parallel",).
    n_tiles = max(1, _cdiv(n, max(16, _round_up(tm, 16))))
    if n_tiles < 2 and n > 256:
        n_tiles = 2
    tm_eff = _round_up(_cdiv(n, n_tiles), 16)
    n_pad = n_tiles * tm_eff

    # x stays f32 in HBM (the bf16 cast happens inside the kernel, hidden
    # under the MXU); only the ragged tail rows are zero-padded (sliced off).
    x_p = x if n_pad == n else jnp.pad(x, ((0, n_pad - n), (0, 0)))

    def full(a):  # whole (small) weight/bias resident in VMEM every step
        return pl.BlockSpec(a.shape, lambda i: (0, 0))

    out = pl.pallas_call(
        _mlp_kernel,
        out_shape=jax.ShapeDtypeStruct((n_tiles, 1, tm_eff), jnp.float32),
        grid_spec=pltpu.PrefetchScalarGridSpec(
            num_scalar_prefetch=0,
            grid=(n_tiles,),
            in_specs=[
                pl.BlockSpec((tm_eff, f), lambda i: (i, 0)),    # x row tile
                full(w1p), full(b1p),
                full(w2p), full(b2p),
                full(w3p), full(b3p),
                full(w4r), full(b4p),
            ],
            # Lane-dense output tile: (1, 1, tm) per step; last two block dims
            # equal the array's last two dims.
            out_specs=pl.BlockSpec((1, 1, tm_eff), lambda i: (i, 0, 0)),
        ),
        compiler_params=pltpu.CompilerParams(
            dimension_semantics=("parallel",)),
    )(x_p, w1p, b1p, w2p, b2p, w3p, b3p, w4r, b4p)

    return out.reshape(n_pad, 1)[:n]


def init_params(key, in_features):
    """Deterministic synthetic params (PyTorch-Linear-like uniform init),
    stored as (in, out) matrices and (1, out) bias rows."""
    dims = [in_features, 128, 52, 13, 1]
    params = []
    for li in range(4):
        fan_in, fan_out = dims[li], dims[li + 1]
        key, kw, kb = jax.random.split(key, 3)
        bound = 1.0 / jnp.sqrt(fan_in)
        w = jax.random.uniform(kw, (fan_in, fan_out), jnp.float32, -bound, bound)
        b = jax.random.uniform(kb, (1, fan_out), jnp.float32, -bound, bound)
        params += [w, b]
    return tuple(params)


def reference_forward(x, params):
    w1, b1, w2, b2, w3, b3, w4, b4 = params
    h = jax.nn.relu(x @ w1 + b1)
    h = jax.nn.relu(h @ w2 + b2)
    h = jax.nn.relu(h @ w3 + b3)
    return jax.nn.sigmoid(h @ w4 + b4)


if __name__ == "__main__":
    key = jax.random.PRNGKey(0)

    # Small shape consistent with the module: x is (batch, in_features).
    batch, in_features = 16, 32
    kx, kp = jax.random.split(key)
    x = jax.random.normal(kx, (batch, in_features), jnp.float32)
    params = init_params(kp, in_features)

    out = jax.block_until_ready(simple_net_forward(x, params))
    ref = reference_forward(x, params)
    assert out.shape == (batch, 1)
    assert jnp.allclose(out, ref, atol=2e-2, rtol=2e-2), "mismatch (small)"

    # Larger run: exercises batch padding, balanced tiles and the >=2-tile
    # (megacore) path.
    batch2, feat2 = 1000, 64
    kx2, kp2 = jax.random.split(kp)
    x2 = jax.random.normal(kx2, (batch2, feat2), jnp.float32)
    params2 = init_params(kp2, feat2)
    out2 = jax.block_until_ready(simple_net_forward(x2, params2, tm=1024))
    ref2 = reference_forward(x2, params2)
    assert out2.shape == (batch2, 1)
    assert jnp.allclose(out2, ref2, atol=2e-2, rtol=2e-2), "mismatch (large)"

    print("KERNEL_OK")
</pallas_src>

<mosaic_0001>
module attributes {stable_mosaic.version = 11 : i64} {
  func.func @_mlp_kernel(%arg0: i32, %arg1: memref<16x32xf32, #tpu.memory_space<vmem>>, %arg2: memref<32x128xbf16, #tpu.memory_space<vmem>>, %arg3: memref<1x128xf32, #tpu.memory_space<vmem>>, %arg4: memref<128x128xbf16, #tpu.memory_space<vmem>>, %arg5: memref<1x128xf32, #tpu.memory_space<vmem>>, %arg6: memref<128x128xbf16, #tpu.memory_space<vmem>>, %arg7: memref<1x128xf32, #tpu.memory_space<vmem>>, %arg8: memref<1x128xbf16, #tpu.memory_space<vmem>>, %arg9: memref<1x1xf32, #tpu.memory_space<vmem>>, %arg10: memref<1x1x16xf32, #tpu.memory_space<vmem>>) attributes {dimension_semantics = [#tpu.dimension_semantics<parallel>], iteration_bounds = array<i64: 1>, scalar_prefetch = 0 : i64, scratch_operands = 0 : i64, tpu.core_type = #tpu.core_type<tc>, window_params = [{transform_indices = @transform_0, window_bounds = array<i64: 16, 32>}, {pipeline_mode = #tpu.pipeline_mode<synchronous>, transform_indices = @transform_1, window_bounds = array<i64: 32, 128>}, {pipeline_mode = #tpu.pipeline_mode<synchronous>, transform_indices = @transform_2, window_bounds = array<i64: 1, 128>}, {pipeline_mode = #tpu.pipeline_mode<synchronous>, transform_indices = @transform_3, window_bounds = array<i64: 128, 128>}, {pipeline_mode = #tpu.pipeline_mode<synchronous>, transform_indices = @transform_4, window_bounds = array<i64: 1, 128>}, {pipeline_mode = #tpu.pipeline_mode<synchronous>, transform_indices = @transform_5, window_bounds = array<i64: 128, 128>}, {pipeline_mode = #tpu.pipeline_mode<synchronous>, transform_indices = @transform_6, window_bounds = array<i64: 1, 128>}, {pipeline_mode = #tpu.pipeline_mode<synchronous>, transform_indices = @transform_7, window_bounds = array<i64: 1, 128>}, {pipeline_mode = #tpu.pipeline_mode<synchronous>, transform_indices = @transform_8, window_bounds = array<i64: 1, 1>}, {transform_indices = @transform_9, window_bounds = array<i64: 1, 1, 16>}]} {
    %c0 = arith.constant 0 : index
    %c0_0 = arith.constant 0 : index
    %0 = vector.load %arg1[%c0, %c0_0] : memref<16x32xf32, #tpu.memory_space<vmem>>, vector<16x32xf32>
    %1 = arith.truncf %0 : vector<16x32xf32> to vector<16x32xbf16>
    %c0_1 = arith.constant 0 : index
    %c0_2 = arith.constant 0 : index
    %2 = vector.load %arg2[%c0_1, %c0_2] : memref<32x128xbf16, #tpu.memory_space<vmem>>, vector<32x128xbf16>
    %cst = arith.constant dense<0.000000e+00> : vector<16x128xf32>
    %3 = tpu.matmul %1, %2, %cst {dimension_numbers = #tpu.dot_dimension_numbers<[1], [0], [0], [1], [0, 0, 1, 1], [], []>} : vector<16x32xbf16>, vector<32x128xbf16>, vector<16x128xf32> -> vector<16x128xf32>
    %c0_3 = arith.constant 0 : index
    %c0_4 = arith.constant 0 : index
    %4 = vector.load %arg3[%c0_3, %c0_4] : memref<1x128xf32, #tpu.memory_space<vmem>>, vector<1x128xf32>
    %5 = vector.broadcast %4 : vector<1x128xf32> to vector<16x128xf32>
    %6 = arith.addf %3, %5 : vector<16x128xf32>
    %cst_5 = arith.constant 0.000000e+00 : f32
    %7 = vector.broadcast %cst_5 : f32 to vector<16x128xf32>
    %8 = arith.maximumf %6, %7 : vector<16x128xf32>
    %9 = arith.truncf %8 : vector<16x128xf32> to vector<16x128xbf16>
    %c0_6 = arith.constant 0 : index
    %c0_7 = arith.constant 0 : index
    %10 = vector.load %arg4[%c0_6, %c0_7] : memref<128x128xbf16, #tpu.memory_space<vmem>>, vector<128x128xbf16>
    %cst_8 = arith.constant dense<0.000000e+00> : vector<16x128xf32>
    %11 = tpu.matmul %9, %10, %cst_8 {dimension_numbers = #tpu.dot_dimension_numbers<[1], [0], [0], [1], [0, 0, 1, 1], [], []>} : vector<16x128xbf16>, vector<128x128xbf16>, vector<16x128xf32> -> vector<16x128xf32>
    %c0_9 = arith.constant 0 : index
    %c0_10 = arith.constant 0 : index
    %12 = vector.load %arg5[%c0_9, %c0_10] : memref<1x128xf32, #tpu.memory_space<vmem>>, vector<1x128xf32>
    %13 = vector.broadcast %12 : vector<1x128xf32> to vector<16x128xf32>
    %14 = arith.addf %11, %13 : vector<16x128xf32>
    %cst_11 = arith.constant 0.000000e+00 : f32
    %15 = vector.broadcast %cst_11 : f32 to vector<16x128xf32>
    %16 = arith.maximumf %14, %15 : vector<16x128xf32>
    %17 = arith.truncf %16 : vector<16x128xf32> to vector<16x128xbf16>
    %c0_12 = arith.constant 0 : index
    %c0_13 = arith.constant 0 : index
    %18 = vector.load %arg6[%c0_12, %c0_13] : memref<128x128xbf16, #tpu.memory_space<vmem>>, vector<128x128xbf16>
    %cst_14 = arith.constant dense<0.000000e+00> : vector<16x128xf32>
    %19 = tpu.matmul %17, %18, %cst_14 {dimension_numbers = #tpu.dot_dimension_numbers<[1], [0], [0], [1], [0, 0, 1, 1], [], []>} : vector<16x128xbf16>, vector<128x128xbf16>, vector<16x128xf32> -> vector<16x128xf32>
    %c0_15 = arith.constant 0 : index
    %c0_16 = arith.constant 0 : index
    %20 = vector.load %arg7[%c0_15, %c0_16] : memref<1x128xf32, #tpu.memory_space<vmem>>, vector<1x128xf32>
    %21 = vector.broadcast %20 : vector<1x128xf32> to vector<16x128xf32>
    %22 = arith.addf %19, %21 : vector<16x128xf32>
    %cst_17 = arith.constant 0.000000e+00 : f32
    %23 = vector.broadcast %cst_17 : f32 to vector<16x128xf32>
    %24 = arith.maximumf %22, %23 : vector<16x128xf32>
    %c0_18 = arith.constant 0 : index
    %c0_19 = arith.constant 0 : index
    %25 = vector.load %arg8[%c0_18, %c0_19] : memref<1x128xbf16, #tpu.memory_space<vmem>>, vector<1x128xbf16>
    %26 = arith.truncf %24 : vector<16x128xf32> to vector<16x128xbf16>
    %cst_20 = arith.constant dense<0.000000e+00> : vector<1x16xf32>
    %27 = tpu.matmul %25, %26, %cst_20 {dimension_numbers = #tpu.dot_dimension_numbers<[1], [1], [0], [0], [0, 0, 1, 0], [], []>} : vector<1x128xbf16>, vector<16x128xbf16>, vector<1x16xf32> -> vector<1x16xf32>
    %c0_21 = arith.constant 0 : index
    %c0_22 = arith.constant 0 : index
    %28 = vector.load %arg9[%c0_21, %c0_22] : memref<1x1xf32, #tpu.memory_space<vmem>>, vector<1x1xf32>
    %29 = vector.broadcast %28 : vector<1x1xf32> to vector<1x16xf32>
    %30 = arith.addf %27, %29 : vector<1x16xf32>
    %31 = arith.negf %30 : vector<1x16xf32>
    %32 = math.exp %31 : vector<1x16xf32>
    %cst_23 = arith.constant 1.000000e+00 : f32
    %33 = vector.broadcast %cst_23 : f32 to vector<1x16xf32>
    %34 = arith.addf %33, %32 : vector<1x16xf32>
    %35 = arith.divf %33, %34 : vector<1x16xf32>
    %c0_24 = arith.constant 0 : index
    %c0_25 = arith.constant 0 : index
    %c0_26 = arith.constant 0 : index
    %36 = vector.load %arg10[%c0_24, %c0_25, %c0_26] : memref<1x1x16xf32, #tpu.memory_space<vmem>>, vector<1x1x16xf32>
    %37 = vector.shape_cast %36 : vector<1x1x16xf32> to vector<1x16xf32>
    %38 = vector.shape_cast %35 : vector<1x16xf32> to vector<1x1x16xf32>
    tpu.vector_store %arg10[%c0_24, %c0_25, %c0_26], %38 {strides = array<i32>} : memref<1x1x16xf32, #tpu.memory_space<vmem>>, vector<1x1x16xf32>,
    return
  }
  func.func @transform_0(%arg0: i32) -> (i32, i32) {
    %c0_i32 = arith.constant 0 : i32
    %c0_i32_0 = arith.constant 0 : i32
    return %arg0, %c0_i32 : i32, i32
  }
  func.func @transform_1(%arg0: i32) -> (i32, i32) {
    %c0_i32 = arith.constant 0 : i32
    %c0_i32_0 = arith.constant 0 : i32
    %c0_i32_1 = arith.constant 0 : i32
    return %c0_i32, %c0_i32_0 : i32, i32
  }
  func.func @transform_2(%arg0: i32) -> (i32, i32) {
    %c0_i32 = arith.constant 0 : i32
    %c0_i32_0 = arith.constant 0 : i32
    %c0_i32_1 = arith.constant 0 : i32
    return %c0_i32, %c0_i32_0 : i32, i32
  }
  func.func @transform_3(%arg0: i32) -> (i32, i32) {
    %c0_i32 = arith.constant 0 : i32
    %c0_i32_0 = arith.constant 0 : i32
    %c0_i32_1 = arith.constant 0 : i32
    return %c0_i32, %c0_i32_0 : i32, i32
  }
  func.func @transform_4(%arg0: i32) -> (i32, i32) {
    %c0_i32 = arith.constant 0 : i32
    %c0_i32_0 = arith.constant 0 : i32
    %c0_i32_1 = arith.constant 0 : i32
    return %c0_i32, %c0_i32_0 : i32, i32
  }
  func.func @transform_5(%arg0: i32) -> (i32, i32) {
    %c0_i32 = arith.constant 0 : i32
    %c0_i32_0 = arith.constant 0 : i32
    %c0_i32_1 = arith.constant 0 : i32
    return %c0_i32, %c0_i32_0 : i32, i32
  }
  func.func @transform_6(%arg0: i32) -> (i32, i32) {
    %c0_i32 = arith.constant 0 : i32
    %c0_i32_0 = arith.constant 0 : i32
    %c0_i32_1 = arith.constant 0 : i32
    return %c0_i32, %c0_i32_0 : i32, i32
  }
  func.func @transform_7(%arg0: i32) -> (i32, i32) {
    %c0_i32 = arith.constant 0 : i32
    %c0_i32_0 = arith.constant 0 : i32
    %c0_i32_1 = arith.constant 0 : i32
    return %c0_i32, %c0_i32_0 : i32, i32
  }
  func.func @transform_8(%arg0: i32) -> (i32, i32) {
    %c0_i32 = arith.constant 0 : i32
    %c0_i32_0 = arith.constant 0 : i32
    %c0_i32_1 = arith.constant 0 : i32
    return %c0_i32, %c0_i32_0 : i32, i32
  }
  func.func @transform_9(%arg0: i32) -> (i32, i32, i32) {
    %c0_i32 = arith.constant 0 : i32
    %c0_i32_0 = arith.constant 0 : i32
    %c0_i32_1 = arith.constant 0 : i32
    return %arg0, %c0_i32, %c0_i32_0 : i32, i32, i32
  }
}

</mosaic_0001>

<llo_original>
// kernel: simple_net_forward.1
$region0: #{simple_net_forward.1}
  #allocation0 [shape = 'u32[]', space=smem, size = 0x4, offset = 0x4, fixed_abs, tag = 'smem constant byte address 0x4 - core index']
  #allocation1 [shape = 'u32[144,128]{1,0:T(1,128)}', space=vmem, size = 0x12000, scoped, tag = 'internal scratch']
  #allocation2 [shape = 'f32[1,1]{1,0:T(1,128)S(1)}', space=vmem, size = 0x200, scoped, tag = 'scoped memory for simple_net_forward.1']
  %s0 = inlined_call_operand.vmem [shape: f32[16,32], index: 0, kind: input, shape index: {}]
  %s1 = inlined_call_operand.vmem [shape: bf16[32,128], index: 1, kind: input, shape index: {}]
  %s2 = inlined_call_operand.vmem [shape: f32[1,128], index: 2, kind: input, shape index: {}]
  %s3 = inlined_call_operand.vmem [shape: bf16[128,128], index: 3, kind: input, shape index: {}]
  %s4 = inlined_call_operand.vmem [shape: f32[1,128], index: 4, kind: input, shape index: {}]
  %s5 = inlined_call_operand.vmem [shape: bf16[128,128], index: 5, kind: input, shape index: {}]
  %s6 = inlined_call_operand.vmem [shape: f32[1,128], index: 6, kind: input, shape index: {}]
  %s7 = inlined_call_operand.vmem [shape: bf16[1,128], index: 7, kind: input, shape index: {}]
  %s8 = inlined_call_operand.<no memory space> [shape: f32[1,1], index: 8, kind: input, shape index: {}]
  %s9 = inlined_call_operand.hbm [shape: f32[1,1,16], index: 9, kind: output, shape index: {}]
  %s10 = sld [smem:[#allocation0]]
  $region46: #{simple_net_forward.1} parent=0
    _
  %s12 = ssub.s32 1, %s10
  %s13 = scalar_select 0, %s12, %s10
  %v14 = vstv %s8
  %15 = vst [vmem:[#allocation2] sm:$0x1] %v14
  $region1: #{simple_net_forward.1} parent=0
    #allocation3 [shape = 'u8[512]{0}', space=vmem, size = 0x400, scoped, tag = 'output window, operand 0, single buffered']
    #allocation4 [shape = 's32[1]{0}', space=sflag, size = 0x4, scoped, tag = 'scoped memory for simple_net_forward.1']
    %16 = vsyncpa [#allocation4], 0
    // Predicated region
    $region2: #{simple_net_forward.1} parent=1 // pred_check
      _
    $region3: #{simple_net_forward.1} parent=1 // pred_check_branch
      %18 = sbr.rel (0) target = $region5
    $region4: #{simple_net_forward.1} parent=1 // pred_region
      _
    $region5: #{simple_net_forward.1} parent=1 // pred_fallthru
      _
    // Predicated region
    $region6: #{simple_net_forward.1} parent=1 // pred_check
      _
    $region7: #{simple_net_forward.1} parent=1 // pred_check_branch
      %20 = sbr.rel (0) target = $region9
    $region8: #{simple_net_forward.1} parent=1 // pred_region
      _
    $region9: #{simple_net_forward.1} parent=1 // pred_fallthru
      _
    // Predicated region
    $region10: #{simple_net_forward.1} parent=1 // pred_check
      _
    $region11: #{simple_net_forward.1} parent=1 // pred_check_branch
      %22 = sbr.rel (0) target = $region13
    $region12: #{simple_net_forward.1} parent=1 // pred_region
      _
    $region13: #{simple_net_forward.1} parent=1 // pred_fallthru
      _
    // Predicated region
    $region14: #{simple_net_forward.1} parent=1 // pred_check
      _
    $region15: #{simple_net_forward.1} parent=1 // pred_check_branch
      %24 = sbr.rel (0) target = $region17
    $region16: #{simple_net_forward.1} parent=1 // pred_region
      _
    $region17: #{simple_net_forward.1} parent=1 // pred_fallthru
      _
    // Predicated region
    $region18: #{simple_net_forward.1} parent=1 // pred_check
      _
    $region19: #{simple_net_forward.1} parent=1 // pred_check_branch
      %26 = sbr.rel (0) target = $region21
    $region20: #{simple_net_forward.1} parent=1 // pred_region
      _
    $region21: #{simple_net_forward.1} parent=1 // pred_fallthru
      _
    // Predicated region
    $region22: #{simple_net_forward.1} parent=1 // pred_check
      _
    $region23: #{simple_net_forward.1} parent=1 // pred_check_branch
      %28 = sbr.rel (0) target = $region25
    $region24: #{simple_net_forward.1} parent=1 // pred_region
      _
    $region25: #{simple_net_forward.1} parent=1 // pred_fallthru
      _
    // Predicated region
    $region26: #{simple_net_forward.1} parent=1 // pred_check
      _
    $region27: #{simple_net_forward.1} parent=1 // pred_check_branch
      %30 = sbr.rel (0) target = $region29
    $region28: #{simple_net_forward.1} parent=1 // pred_region
      _
    $region29: #{simple_net_forward.1} parent=1 // pred_fallthru
      _
    // Predicated region
    $region30: #{simple_net_forward.1} parent=1 // pred_check
      _
    $region31: #{simple_net_forward.1} parent=1 // pred_check_branch
      %32 = sbr.rel (0) target = $region33
    $region32: #{simple_net_forward.1} parent=1 // pred_region
      _
    $region33: #{simple_net_forward.1} parent=1 // pred_fallthru
      _
    // Predicated region
    $region34: #{simple_net_forward.1} parent=1 // pred_check
      _
    $region35: #{simple_net_forward.1} parent=1 // pred_check_branch
      %34 = sbr.rel (0) target = $region37
    $region36: #{simple_net_forward.1} parent=1 // pred_region
      _
    $region37: #{simple_net_forward.1} parent=1 // pred_fallthru
      _
    %v36 = vld [vmem:[%s0] sm:$0xff]
    %v37 = vld [vmem:[%s0 + $0x8] sm:$0xff]
    %v38 = vpack.c.bf16 %v37, %v36
    %v39 = vld [vmem:[%s1] sm:$0xf]
    %v40 = vld [vmem:[%s1 + $0x4] sm:$0xf]
    %v41 = vld [vmem:[%s1 + $0x8] sm:$0xf]
    %v42 = vld [vmem:[%s1 + $0xc] sm:$0xf]
    %v43 = vld [vmem:[%s2] sm:$0x1]
    %v45 = vlaneseq
    %v46 = vshrl.u32 %v45, 7
    %v47 = vsub.s32 0, %v46
    %v48 = vrot.slane %v43, %v47
    %v54 = vunpack.c.l.b16 %v39
    %v55 = vunpack.c.l.b16 %v40
    %v56 = vunpack.c.l.b16 %v41
    %v57 = vunpack.c.l.b16 %v42
    %v58 = vpack.c.b16 %v55, %v54
    %v59 = vpack.c.b16 %v57, %v56
    %vm62 = vcmask 261120
    %v64 = vsel %vm62, %v38, 0
    %66 = vmatprep.subr.bf16.mxu0 0
    %67 = vmatpush1.bf16.msra.mxu0 0
    %68 = vmatprep.subr.bf16.mxu0 0
    %69 = vmatpush1.bf16.msra.mxu0 0
    %70 = vmatprep.subr.bf16.mxu0 0
    %71 = vmatpush1.bf16.msra.mxu0 0
    %72 = vmatprep.subr.bf16.mxu0 0
    %73 = vmatpush1.bf16.msra.mxu0 0
    %74 = vmatprep.subr.bf16.mxu0 0
    %75 = vmatpush1.bf16.msra.mxu0 0
    %76 = vmatprep.subr.bf16.mxu0 0
    %77 = vmatpush1.bf16.msra.mxu0 0
    %78 = vmatprep.subr.bf16.mxu0 0
    %79 = vmatpush1.bf16.msra.mxu0 %v59
    %80 = vmatprep.subr.bf16.mxu0 0
    %81 = vmatpush1.bf16.msra.mxu0 %v58
    %82 = vmatprep.subr.bf16.mxu0 0
    %83 = vmatpush2.bf16.msra.mxu0 0
    %84 = vmatprep.subr.bf16.mxu0 0
    %85 = vmatpush2.bf16.msra.mxu0 0
    %86 = vmatprep.subr.bf16.mxu0 0
    %87 = vmatpush2.bf16.msra.mxu0 0
    %88 = vmatprep.subr.bf16.mxu0 0
    %89 = vmatpush2.bf16.msra.mxu0 0
    %90 = vmatprep.subr.bf16.mxu0 0
    %91 = vmatpush2.bf16.msra.mxu0 0
    %92 = vmatprep.subr.bf16.mxu0 0
    %93 = vmatpush2.bf16.msra.mxu0 0
    %94 = vmatprep.subr.bf16.mxu0 0
    %95 = vmatpush2.bf16.msra.mxu0 0
    %96 = vmatprep.subr.bf16.mxu0 0
    %97 = vmatpush2.bf16.msra.mxu0 0
    %98 = vmatprep.mubr.bf16.mxu0 0
    %99 = vmatmul.mubr.bf16.gmra.mxu0 %v64
    %v100 = vpop.f32.mrf.mxu0
    %v101 = vadd.f32 %v48, %v100
    %v102 = vpop.f32.mrf.mxu0
    %v103 = vpop.f32.mrf.mxu0
    %v104 = vadd.f32 %v48, %v103
    %v105 = vpop.f32.mrf.mxu0
    %106 = vdwg.mxu0
    %v107 = vmax.f32 %v101, 0.0
    %v108 = vmax.f32 %v104, 0.0
    %v109 = vpack.c.bf16 %v108, %v107
    %v110 = vld [vmem:[%s3] sm:$0xf]
    %v111 = vld [vmem:[%s3 + $0x4] sm:$0xf]
    %v112 = vld [vmem:[%s3 + $0x8] sm:$0xf]
    %v113 = vld [vmem:[%s3 + $0xc] sm:$0xf]
    %v114 = vld [vmem:[%s3 + $0x10] sm:$0xf]
    %v115 = vld [vmem:[%s3 + $0x14] sm:$0xf]
    %v116 = vld [vmem:[%s3 + $0x18] sm:$0xf]
    %v117 = vld [vmem:[%s3 + $0x1c] sm:$0xf]
    %v118 = vld [vmem:[%s3 + $0x20] sm:$0xf]
    %v119 = vld [vmem:[%s3 + $0x24] sm:$0xf]
    %v120 = vld [vmem:[%s3 + $0x28] sm:$0xf]
    %v121 = vld [vmem:[%s3 + $0x2c] sm:$0xf]
    %v122 = vld [vmem:[%s3 + $0x30] sm:$0xf]
    %v123 = vld [vmem:[%s3 + $0x34] sm:$0xf]
    %v124 = vld [vmem:[%s3 + $0x38] sm:$0xf]
    %v125 = vld [vmem:[%s3 + $0x3c] sm:$0xf]
    %v126 = vld [vmem:[%s4] sm:$0x1]
    %v128 = vlaneseq
    %v129 = vshrl.u32 %v128, 7
    %v130 = vsub.s32 0, %v129
    %v131 = vrot.slane %v126, %v130
    %v149 = vunpack.c.l.b16 %v110
    %v150 = vunpack.c.l.b16 %v111
    %v151 = vunpack.c.l.b16 %v112
    %v152 = vunpack.c.l.b16 %v113
    %v153 = vunpack.c.l.b16 %v114
    %v154 = vunpack.c.l.b16 %v115
    %v155 = vunpack.c.l.b16 %v116
    %v156 = vunpack.c.l.b16 %v117
    %v157 = vunpack.c.l.b16 %v118
    %v158 = vunpack.c.l.b16 %v119
    %v159 = vunpack.c.l.b16 %v120
    %v160 = vunpack.c.l.b16 %v121
    %v161 = vunpack.c.l.b16 %v122
    %v162 = vunpack.c.l.b16 %v123
    %v163 = vunpack.c.l.b16 %v124
    %v164 = vunpack.c.l.b16 %v125
    %v165 = vpack.c.b16 %v150, %v149
    %v166 = vpack.c.b16 %v152, %v151
    %v167 = vpack.c.b16 %v154, %v153
    %v168 = vpack.c.b16 %v156, %v155
    %v169 = vpack.c.b16 %v158, %v157
    %v170 = vpack.c.b16 %v160, %v159
    %v171 = vpack.c.b16 %v162, %v161
    %v172 = vpack.c.b16 %v164, %v163
    %181 = vmatprep.subr.bf16.mxu0 0
    %182 = vmatpush1.bf16.msra.mxu0 %v172
    %183 = vmatprep.subr.bf16.mxu0 0
    %184 = vmatpush1.bf16.msra.mxu0 %v171
    %185 = vmatprep.subr.bf16.mxu0 0
    %186 = vmatpush1.bf16.msra.mxu0 %v170
    %187 = vmatprep.subr.bf16.mxu0 0
    %188 = vmatpush1.bf16.msra.mxu0 %v169
    %189 = vmatprep.subr.bf16.mxu0 0
    %190 = vmatpush1.bf16.msra.mxu0 %v168
    %191 = vmatprep.subr.bf16.mxu0 0
    %192 = vmatpush1.bf16.msra.mxu0 %v167
    %193 = vmatprep.subr.bf16.mxu0 0
    %194 = vmatpush1.bf16.msra.mxu0 %v166
    %195 = vmatprep.subr.bf16.mxu0 0
    %196 = vmatpush1.bf16.msra.mxu0 %v165
    %197 = vmatprep.subr.bf16.mxu0 0
    %198 = vmatpush2.bf16.msra.mxu0 0
    %199 = vmatprep.subr.bf16.mxu0 0
    %200 = vmatpush2.bf16.msra.mxu0 0
    %201 = vmatprep.subr.bf16.mxu0 0
    %202 = vmatpush2.bf16.msra.mxu0 0
    %203 = vmatprep.subr.bf16.mxu0 0
    %204 = vmatpush2.bf16.msra.mxu0 0
    %205 = vmatprep.subr.bf16.mxu0 0
    %206 = vmatpush2.bf16.msra.mxu0 0
    %207 = vmatprep.subr.bf16.mxu0 0
    %208 = vmatpush2.bf16.msra.mxu0 0
    %209 = vmatprep.subr.bf16.mxu0 0
    %210 = vmatpush2.bf16.msra.mxu0 0
    %211 = vmatprep.subr.bf16.mxu0 0
    %212 = vmatpush2.bf16.msra.mxu0 0
    %213 = vmatprep.mubr.bf16.mxu0 0
    %214 = vmatmul.mubr.bf16.gmra.mxu0 %v109
    %v215 = vpop.f32.mrf.mxu0
    %v216 = vadd.f32 %v131, %v215
    %v217 = vpop.f32.mrf.mxu0
    %v218 = vpop.f32.mrf.mxu0
    %v219 = vadd.f32 %v131, %v218
    %v220 = vpop.f32.mrf.mxu0
    %221 = vdwg.mxu0
    %v222 = vmax.f32 %v216, 0.0
    %v223 = vmax.f32 %v219, 0.0
    %v224 = vpack.c.bf16 %v223, %v222
    %v225 = vld [vmem:[%s5] sm:$0xf]
    %v226 = vld [vmem:[%s5 + $0x4] sm:$0xf]
    %v227 = vld [vmem:[%s5 + $0x8] sm:$0xf]
    %v228 = vld [vmem:[%s5 + $0xc] sm:$0xf]
    %v229 = vld [vmem:[%s5 + $0x10] sm:$0xf]
    %v230 = vld [vmem:[%s5 + $0x14] sm:$0xf]
    %v231 = vld [vmem:[%s5 + $0x18] sm:$0xf]
    %v232 = vld [vmem:[%s5 + $0x1c] sm:$0xf]
    %v233 = vld [vmem:[%s5 + $0x20] sm:$0xf]
    %v234 = vld [vmem:[%s5 + $0x24] sm:$0xf]
    %v235 = vld [vmem:[%s5 + $0x28] sm:$0xf]
    %v236 = vld [vmem:[%s5 + $0x2c] sm:$0xf]
    %v237 = vld [vmem:[%s5 + $0x30] sm:$0xf]
    %v238 = vld [vmem:[%s5 + $0x34] sm:$0xf]
    %v239 = vld [vmem:[%s5 + $0x38] sm:$0xf]
    %v240 = vld [vmem:[%s5 + $0x3c] sm:$0xf]
    %v241 = vld [vmem:[%s6] sm:$0x1]
    %v243 = vlaneseq
    %v244 = vshrl.u32 %v243, 7
    %v245 = vsub.s32 0, %v244
    %v246 = vrot.slane %v241, %v245
    %v264 = vunpack.c.l.b16 %v225
    %v265 = vunpack.c.l.b16 %v226
    %v266 = vunpack.c.l.b16 %v227
    %v267 = vunpack.c.l.b16 %v228
    %v268 = vunpack.c.l.b16 %v229
    %v269 = vunpack.c.l.b16 %v230
    %v270 = vunpack.c.l.b16 %v231
    %v271 = vunpack.c.l.b16 %v232
    %v272 = vunpack.c.l.b16 %v233
    %v273 = vunpack.c.l.b16 %v234
    %v274 = vunpack.c.l.b16 %v235
    %v275 = vunpack.c.l.b16 %v236
    %v276 = vunpack.c.l.b16 %v237
    %v277 = vunpack.c.l.b16 %v238
    %v278 = vunpack.c.l.b16 %v239
    %v279 = vunpack.c.l.b16 %v240
    %v280 = vpack.c.b16 %v265, %v264
    %v281 = vpack.c.b16 %v267, %v266
    %v282 = vpack.c.b16 %v269, %v268
    %v283 = vpack.c.b16 %v271, %v270
    %v284 = vpack.c.b16 %v273, %v272
    %v285 = vpack.c.b16 %v275, %v274
    %v286 = vpack.c.b16 %v277, %v276
    %v287 = vpack.c.b16 %v279, %v278
    %296 = vmatprep.subr.bf16.mxu0 0
    %297 = vmatpush1.bf16.msra.mxu0 %v287
    %298 = vmatprep.subr.bf16.mxu0 0
    %299 = vmatpush1.bf16.msra.mxu0 %v286
    %300 = vmatprep.subr.bf16.mxu0 0
    %301 = vmatpush1.bf16.msra.mxu0 %v285
    %302 = vmatprep.subr.bf16.mxu0 0
    %303 = vmatpush1.bf16.msra.mxu0 %v284
    %304 = vmatprep.subr.bf16.mxu0 0
    %305 = vmatpush1.bf16.msra.mxu0 %v283
    %306 = vmatprep.subr.bf16.mxu0 0
    %307 = vmatpush1.bf16.msra.mxu0 %v282
    %308 = vmatprep.subr.bf16.mxu0 0
    %309 = vmatpush1.bf16.msra.mxu0 %v281
    %310 = vmatprep.subr.bf16.mxu0 0
    %311 = vmatpush1.bf16.msra.mxu0 %v280
    %312 = vmatprep.subr.bf16.mxu0 0
    %313 = vmatpush2.bf16.msra.mxu0 0
    %314 = vmatprep.subr.bf16.mxu0 0
    %315 = vmatpush2.bf16.msra.mxu0 0
    %316 = vmatprep.subr.bf16.mxu0 0
    %317 = vmatpush2.bf16.msra.mxu0 0
    %318 = vmatprep.subr.bf16.mxu0 0
    %319 = vmatpush2.bf16.msra.mxu0 0
    %320 = vmatprep.subr.bf16.mxu0 0
    %321 = vmatpush2.bf16.msra.mxu0 0
    %322 = vmatprep.subr.bf16.mxu0 0
    %323 = vmatpush2.bf16.msra.mxu0 0
    %324 = vmatprep.subr.bf16.mxu0 0
    %325 = vmatpush2.bf16.msra.mxu0 0
    %326 = vmatprep.subr.bf16.mxu0 0
    %327 = vmatpush2.bf16.msra.mxu0 0
    %328 = vmatprep.mubr.bf16.mxu0 0
    %329 = vmatmul.mubr.bf16.gmra.mxu0 %v224
    %v330 = vpop.f32.mrf.mxu0
    %v331 = vadd.f32 %v246, %v330
    %v332 = vpop.f32.mrf.mxu0
    %v333 = vpop.f32.mrf.mxu0
    %v334 = vadd.f32 %v246, %v333
    %v335 = vpop.f32.mrf.mxu0
    %336 = vdwg.mxu0
    %v337 = vmax.f32 %v331, 0.0
    %v338 = vmax.f32 %v334, 0.0
    %v339 = vld [vmem:[%s7] sm:$0x1]
    %v340 = vpack.c.bf16 %v338, %v337
    %v341 = vld [vmem:[#allocation2] sm:$0x1]
    %343 = vset.pattern.permute.xlu0 0
    %344 = vperm.xlu0 %343, %v341
    %v345 = vpop.permute.xlu0 %344
    %v347 = vlaneseq
    %v348 = vshrl.u32 %v347, 7
    %v349 = vsub.s32 0, %v348
    %v350 = vrot.slane %v345, %v349
    %351 = vmatprep.subr.bf16.mxu0 0
    %352 = vmatpush1.bf16.xpose.msra.mxu0 0
    %353 = vmatprep.subr.bf16.mxu0 0
    %354 = vmatpush1.bf16.xpose.msra.mxu0 0
    %355 = vmatprep.subr.bf16.mxu0 0
    %356 = vmatpush1.bf16.xpose.msra.mxu0 0
    %357 = vmatprep.subr.bf16.mxu0 0
    %358 = vmatpush1.bf16.xpose.msra.mxu0 0
    %359 = vmatprep.subr.bf16.mxu0 0
    %360 = vmatpush1.bf16.xpose.msra.mxu0 0
    %361 = vmatprep.subr.bf16.mxu0 0
    %362 = vmatpush1.bf16.xpose.msra.mxu0 0
    %363 = vmatprep.subr.bf16.mxu0 0
    %364 = vmatpush1.bf16.xpose.msra.mxu0 0
    %365 = vmatprep.subr.bf16.mxu0 0
    %366 = vmatpush1.bf16.xpose.msra.mxu0 %v340
    %367 = vmatprep.subr.bf16.mxu0 0
    %368 = vmatpush2.bf16.xpose.msra.mxu0 0
    %369 = vmatprep.subr.bf16.mxu0 0
    %370 = vmatpush2.bf16.xpose.msra.mxu0 0
    %371 = vmatprep.subr.bf16.mxu0 0
    %372 = vmatpush2.bf16.xpose.msra.mxu0 0
    %373 = vmatprep.subr.bf16.mxu0 0
    %374 = vmatpush2.bf16.xpose.msra.mxu0 0
    %375 = vmatprep.subr.bf16.mxu0 0
    %376 = vmatpush2.bf16.xpose.msra.mxu0 0
    %377 = vmatprep.subr.bf16.mxu0 0
    %378 = vmatpush2.bf16.xpose.msra.mxu0 0
    %379 = vmatprep.subr.bf16.mxu0 0
    %380 = vmatpush2.bf16.xpose.msra.mxu0 0
    %381 = vmatprep.subr.bf16.mxu0 0
    %382 = vmatpush2.bf16.xpose.msra.mxu0 0
    %383 = vmatprep.mubr.bf16.mxu0 0
    %384 = vmatmul.mubr.bf16.gmra.mxu0 %v339
    %v385 = vpop.f32.mrf.mxu0
    %v386 = vadd.f32 %v350, %v385
    %v387 = vpop.f32.mrf.mxu0
    %v388 = vpop.f32.mrf.mxu0
    %v389 = vpop.f32.mrf.mxu0
    %390 = vdwg.mxu0
    %v391 = vxor.u32 %v386, 2147483648
    %v392 = vmul.f32 %v391, 1.442695
    %v393 = vpow.pop %v392
    %v394 = vadd.f32 %v393, 1.0
    %v395 = vrcp.pop %v394
    %v396 = vmul.f32 1.0, %v395
    %vm397 = vcmask 122880
    %398 = vst.msk [vmem:[#allocation3] sm:$0x1] %vm397, %v396
    // Predicated region
    $region38: #{simple_net_forward.1} parent=1 // pred_check
      _
    $region39: #{simple_net_forward.1} parent=1 // pred_check_branch
      %400 = sbr.rel (0) target = $region41
    $region40: #{simple_net_forward.1} parent=1 // pred_region
      %s402 = ssub.s32 16, 16
      %403 = vsyncadd [#allocation4], %s402
      %s405 = sshll.u32 [#allocation3], 4
      %s406 = int_to_ptr.vmem [resolvable:$true] %s405
      %408 = dma.vmem_to_hbm [thread:$0]  %s406, 16, %s9, [#allocation4]
    $region41: #{simple_net_forward.1} parent=1 // pred_fallthru
      _
    // Predicated region
    $region42: #{simple_net_forward.1} parent=1 // pred_check
      _
    $region43: #{simple_net_forward.1} parent=1 // pred_check_branch
      %410 = sbr.rel (0) target = $region45
    $region44: #{simple_net_forward.1} parent=1 // pred_region
      %411 = dma.done [#allocation4], 16
    $region45: #{simple_net_forward.1} parent=1 // pred_fallthru
      _
    %412 = vsyncpa [#allocation4], 1

</llo_original>
